<compile_context>
chip_gen: v7x
topology: tpu7x:2x2x1
jax: 0.10.0
libtpu: 0.0.40
codegen_flags: <defaults>
</compile_context>

<pallas_src>
import jax
import jax.numpy as jnp
from jax.experimental import pallas as pl
from jax.experimental.pallas import tpu as pltpu

EPS = 1e-12  # torch.nn.functional.normalize default eps


def _l2norm_dim0_kernel(x_ref, o_ref):
    # x_ref / o_ref: (M, TN) tile — full row extent, a lane-aligned slab of columns.
    x = x_ref[...].astype(jnp.float32)
    sq_sum = jnp.sum(x * x, axis=0, keepdims=True)          # (1, TN) cross-sublane reduce
    inv = jax.lax.rsqrt(jnp.maximum(sq_sum, EPS * EPS))     # (1, TN), EUP
    o_ref[...] = (x * inv).astype(o_ref.dtype)              # broadcast multiply


def _vmem_budget_bytes() -> int:
    # Physical VMEM differs per generation (v5e/v6e: 128 MiB, v7x: 64 MiB);
    # budget half of it for this kernel's double-buffered in+out tiles.
    try:
        cap = pltpu.get_tpu_info().vmem_capacity_bytes
    except Exception:
        cap = 64 * 1024 * 1024  # conservative (v7x-sized) fallback
    return cap // 2


def _pick_tile_n(M: int, N: int, dtype) -> int:
    dtype_bytes = jnp.dtype(dtype).itemsize
    budget = _vmem_budget_bytes()
    # Per lane-column cost of one grid step: (input + output) x 2 pipeline
    # buffers, plus f32 working copies inside the kernel when input is narrow.
    per_col = 4 * M * dtype_bytes
    if jnp.dtype(dtype) != jnp.dtype(jnp.float32):
        per_col += 2 * M * 4
    max_tn = budget // max(per_col, 1)
    tn = (max_tn // 128) * 128
    tn = min(max(tn, 128), 2048)          # streaming sweet spot: 512-2048 lanes
    n_pad = pl.cdiv(N, 128) * 128         # lane-aligned column extent
    if n_pad >= 256:
        # Keep at least 2 grid steps so the parallel axis can use both
        # TensorCores on v7x (and DMA still pipelines on v5e/v6e).
        half = pl.cdiv(n_pad // 2, 128) * 128
        tn = min(tn, half)
    else:
        tn = 128
    return tn


def _l2_normalize_dim0_2d(feat: jax.Array) -> jax.Array:
    M, N = feat.shape
    dtype_bytes = jnp.dtype(feat.dtype).itemsize

    tn = _pick_tile_n(M, N, feat.dtype)

    # Full-row column slabs must fit VMEM even at the minimum tile width.
    # TODO(synk): for very large M (full-row slab > VMEM even at tn=128), add a
    # second "arbitrary" grid axis over M with a (1, tn) f32 sq_sum scratch
    # accumulator (two-pass reduce + rescale).
    assert 4 * M * 128 * dtype_bytes <= _vmem_budget_bytes(), (
        "M too large for single-pass full-row tiling; needs two-pass variant")

    grid = (pl.cdiv(N, tn),)

    # Raise the scoped VMEM limit enough to hold the double-buffered tiles
    # (with headroom), capped at the per-generation budget.
    per_step = 4 * M * tn * dtype_bytes
    vmem_limit = int(min(_vmem_budget_bytes(),
                         max(per_step * 2, 32 * 1024 * 1024)))

    return pl.pallas_call(
        _l2norm_dim0_kernel,
        out_shape=jax.ShapeDtypeStruct((M, N), feat.dtype),
        grid_spec=pltpu.PrefetchScalarGridSpec(
            num_scalar_prefetch=0,
            grid=grid,
            in_specs=[pl.BlockSpec((M, tn), lambda j: (0, j))],
            out_specs=pl.BlockSpec((M, tn), lambda j: (0, j)),
        ),
        compiler_params=pltpu.CompilerParams(
            dimension_semantics=("parallel",),
            vmem_limit_bytes=vmem_limit,
        ),
    )(feat)


def l2_normalize_dim0(feat: jax.Array) -> jax.Array:
    """Equivalent of torch.nn.functional.normalize(feat, p=2, dim=0).

    Accepts any rank >= 1; trailing dims are collapsed into the lane axis
    (the dim-0 reduction is independent per trailing multi-index, so the
    collapse is semantics-preserving), then restored.
    """
    assert feat.ndim >= 1
    orig_shape = feat.shape
    M = orig_shape[0]
    N = 1
    for d in orig_shape[1:]:
        N *= d
    feat2d = feat.reshape(M, N)
    out2d = _l2_normalize_dim0_2d(feat2d)
    return out2d.reshape(orig_shape)


if __name__ == "__main__":
    key = jax.random.PRNGKey(0)
    k0, k1, k2 = jax.random.split(key, 3)

    def ref_l2norm_dim0(x):
        denom = jnp.maximum(
            jnp.sqrt(jnp.sum(x * x, axis=0, keepdims=True)), EPS)
        return x / denom

    # Small shape consistent with the module: seq=8, hidden=32.
    feat = jax.random.normal(k0, (8, 32), dtype=jnp.float32)
    out = jax.block_until_ready(l2_normalize_dim0(feat))
    ok = bool(jnp.allclose(out, ref_l2norm_dim0(feat), atol=1e-5, rtol=1e-5))

    # Multi-block + ragged-lane path (still small).
    feat2 = jax.random.normal(k1, (128, 400), dtype=jnp.float32)
    out2 = jax.block_until_ready(l2_normalize_dim0(feat2))
    ok = ok and bool(jnp.allclose(out2, ref_l2norm_dim0(feat2), atol=1e-5, rtol=1e-5))

    # Higher-rank input (dim-0 normalize over [seq, heads, hidden]).
    feat3 = jax.random.normal(k2, (8, 4, 32), dtype=jnp.float32)
    out3 = jax.block_until_ready(l2_normalize_dim0(feat3))
    ok = ok and bool(jnp.allclose(out3, ref_l2norm_dim0(feat3), atol=1e-5, rtol=1e-5))

    assert ok, "mismatch vs reference"
    print("KERNEL_OK")
</pallas_src>

<mosaic_0001>
module attributes {stable_mosaic.version = 11 : i64} {
  func.func @_l2norm_dim0_kernel(%arg0: i32, %arg1: memref<8x128xf32, #tpu.memory_space<vmem>>, %arg2: memref<8x128xf32, #tpu.memory_space<vmem>>) attributes {dimension_semantics = [#tpu.dimension_semantics<parallel>], iteration_bounds = array<i64: 1>, scalar_prefetch = 0 : i64, scratch_operands = 0 : i64, tpu.core_type = #tpu.core_type<tc>, window_params = [{transform_indices = @transform_0, window_bounds = array<i64: 8, 128>}, {transform_indices = @transform_1, window_bounds = array<i64: 8, 128>}]} {
    %c0 = arith.constant 0 : index
    %c0_0 = arith.constant 0 : index
    %0 = vector.load %arg1[%c0, %c0_0] : memref<8x128xf32, #tpu.memory_space<vmem>>, vector<8x128xf32>
    %1 = arith.mulf %0, %0 : vector<8x128xf32>
    %cst = arith.constant dense<0.000000e+00> : vector<128xf32>
    %2 = vector.multi_reduction <add>, %1, %cst [0] : vector<8x128xf32> to vector<128xf32>
    %3 = vector.shape_cast %2 : vector<128xf32> to vector<1x128xf32>
    %cst_1 = arith.constant 1.000000e-24 : f32
    %4 = vector.broadcast %cst_1 : f32 to vector<1x128xf32>
    %5 = arith.maximumf %3, %4 : vector<1x128xf32>
    %6 = math.rsqrt %5 : vector<1x128xf32>
    %7 = vector.broadcast %6 : vector<1x128xf32> to vector<8x128xf32>
    %8 = arith.mulf %0, %7 : vector<8x128xf32>
    %c0_2 = arith.constant 0 : index
    %c0_3 = arith.constant 0 : index
    %9 = vector.load %arg2[%c0_2, %c0_3] : memref<8x128xf32, #tpu.memory_space<vmem>>, vector<8x128xf32>
    tpu.vector_store %arg2[%c0_2, %c0_3], %8 {strides = array<i32>} : memref<8x128xf32, #tpu.memory_space<vmem>>, vector<8x128xf32>,
    return
  }
  func.func @transform_0(%arg0: i32) -> (i32, i32) {
    %c0_i32 = arith.constant 0 : i32
    %c0_i32_0 = arith.constant 0 : i32
    return %c0_i32, %arg0 : i32, i32
  }
  func.func @transform_1(%arg0: i32) -> (i32, i32) {
    %c0_i32 = arith.constant 0 : i32
    %c0_i32_0 = arith.constant 0 : i32
    return %c0_i32, %arg0 : i32, i32
  }
}

</mosaic_0001>

<llo_original>
// kernel: tpu_custom_call.1
$region0: #{tpu_custom_call.1}
  #allocation0 [shape = 'u32[]', space=smem, size = 0x4, offset = 0x4, fixed_abs, tag = 'smem constant byte address 0x4 - core index']
  #allocation1 [shape = 'u32[144,128]{1,0:T(1,128)}', space=vmem, size = 0x12000, scoped, tag = 'internal scratch']
  %s0 = inlined_call_operand.hbm [shape: f32[8,32], index: 0, kind: input, shape index: {}]
  %s1 = inlined_call_operand.hbm [shape: f32[8,32], index: 1, kind: output, shape index: {}]
  %s2 = sld [smem:[#allocation0]]
  $region18: #{tpu_custom_call.1} parent=0
    _
  %s4 = ssub.s32 1, %s2
  %s5 = scalar_select 0, %s4, %s2
  $region1: #{tpu_custom_call.1} parent=0
    #allocation2 [shape = 'u8[4096]{0}', space=vmem, size = 0x1000, scoped, tag = 'input window, operand 0, single buffered']
    #allocation3 [shape = 's32[1]{0}', space=sflag, size = 0x4, scoped, tag = 'scoped memory for tpu_custom_call.1']
    #allocation4 [shape = 's32[1]{0}', space=sflag, size = 0x4, scoped, tag = 'scoped memory for tpu_custom_call.1']
    #allocation5 [shape = 'u8[4096]{0}', space=vmem, size = 0x1000, scoped, tag = 'output window, operand 0, single buffered']
    %6 = vsyncpa [#allocation3], 0
    %7 = vsyncpa [#allocation4], 0
    // Predicated region
    $region2: #{tpu_custom_call.1} parent=1 // pred_check
      _
    $region3: #{tpu_custom_call.1} parent=1 // pred_check_branch
      %9 = sbr.rel (0) target = $region5
    $region4: #{tpu_custom_call.1} parent=1 // pred_region
      %s11 = ssub.s32 128, 128
      %12 = vsyncadd [#allocation3], %s11
      %s14 = sshll.u32 [#allocation2], 4
      %s15 = int_to_ptr.vmem [resolvable:$true] %s14
      %17 = dma.hbm_to_vmem [thread:$0]  %s0, 128, %s15, [#allocation3]
    $region5: #{tpu_custom_call.1} parent=1 // pred_fallthru
      _
    // Predicated region
    $region6: #{tpu_custom_call.1} parent=1 // pred_check
      _
    $region7: #{tpu_custom_call.1} parent=1 // pred_check_branch
      %19 = sbr.rel (0) target = $region9
    $region8: #{tpu_custom_call.1} parent=1 // pred_region
      %20 = dma.done [#allocation3], 128
    $region9: #{tpu_custom_call.1} parent=1 // pred_fallthru
      _
    %v21 = vld [vmem:[#allocation2] sm:$0xff]
    %v22 = vmul.f32 %v21, %v21
    %v23 = vrot.slane %v22, 4
    %v24 = vadd.f32 %v22, %v23
    %v25 = vrot.slane %v24, 2
    %v26 = vadd.f32 %v24, %v25
    %v27 = vrot.slane %v26, 1
    %v28 = vadd.f32 %v26, %v27
    %v29 = vmax.f32 %v28, 1e-24
    %v30 = vrsqrt.pop %v29
    %v31 = vmul.f32 %v21, %v30
    %32 = vst [vmem:[#allocation5] sm:$0xff] %v31
    // Predicated region
    $region10: #{tpu_custom_call.1} parent=1 // pred_check
      _
    $region11: #{tpu_custom_call.1} parent=1 // pred_check_branch
      %34 = sbr.rel (0) target = $region13
    $region12: #{tpu_custom_call.1} parent=1 // pred_region
      %s36 = ssub.s32 128, 128
      %37 = vsyncadd [#allocation4], %s36
      %s39 = sshll.u32 [#allocation5], 4
      %s40 = int_to_ptr.vmem [resolvable:$true] %s39
      %42 = dma.vmem_to_hbm [thread:$0]  %s40, 128, %s1, [#allocation4]
    $region13: #{tpu_custom_call.1} parent=1 // pred_fallthru
      _
    // Predicated region
    $region14: #{tpu_custom_call.1} parent=1 // pred_check
      _
    $region15: #{tpu_custom_call.1} parent=1 // pred_check_branch
      %44 = sbr.rel (0) target = $region17
    $region16: #{tpu_custom_call.1} parent=1 // pred_region
      %45 = dma.done [#allocation4], 128
    $region17: #{tpu_custom_call.1} parent=1 // pred_fallthru
      _
    %46 = vsyncpa [#allocation3], 1
    %47 = vsyncpa [#allocation4], 1

</llo_original>
